<compile_context>
chip_gen: v7x
topology: tpu7x:2x2x1
jax: 0.10.0
libtpu: 0.0.40
codegen_flags: <defaults>
</compile_context>

<pallas_src>
import jax
import jax.numpy as jnp
from jax.experimental import pallas as pl
from jax.experimental.pallas import tpu as pltpu


_TARGET_CHUNK_BYTES = 8 << 20     # aim for ~8 MiB per DMA chunk
_MAX_DMA_CHUNKS = 16              # cap on concurrently in-flight DMAs
_SMALL_BYPASS_BYTES = 1 << 20     # below this, skip pallas dispatch overhead


def _make_dma_copy_kernel(chunks):
    """Kernel copying src->dst with len(chunks) concurrent HBM->HBM DMAs.

    `chunks` is a static Python list of (start_row, num_rows) along axis 0.
    """
    n_chunks = len(chunks)

    def kernel(x_ref, o_ref, sems):
        copies = []
        if n_chunks == 1:
            cp = pltpu.make_async_copy(x_ref, o_ref, sems.at[0])
            cp.start()
            copies.append(cp)
        else:
            for c, (start, rows) in enumerate(chunks):
                cp = pltpu.make_async_copy(
                    x_ref.at[pl.ds(start, rows)],
                    o_ref.at[pl.ds(start, rows)],
                    sems.at[c],
                )
                cp.start()
                copies.append(cp)
        # Wait only after all DMAs are in flight so they overlap on the DMA
        # engines (the TensorCore does no vector work at all in this kernel).
        for cp in copies:
            cp.wait()

    return kernel


def _split_rows(rows, row_bytes):
    """Static chunking of the leading axis into <= _MAX_DMA_CHUNKS pieces,
    each targeting ~_TARGET_CHUNK_BYTES."""
    total_bytes = rows * row_bytes
    if rows <= 1 or total_bytes <= _TARGET_CHUNK_BYTES:
        return [(0, rows)]
    n_chunks = int(min(_MAX_DMA_CHUNKS,
                       max(1, total_bytes // _TARGET_CHUNK_BYTES),
                       rows))
    base, rem = divmod(rows, n_chunks)
    chunks, start = [], 0
    for c in range(n_chunks):
        sz = base + (1 if c < rem else 0)
        chunks.append((start, sz))
        start += sz
    return chunks


def _pallas_dma_copy(buf: jax.Array) -> jax.Array:
    """Materialize a copy of `buf` (original shape, no relayout) via direct
    HBM->HBM DMA.  No VMEM staging, no compute."""
    rows = buf.shape[0] if buf.ndim >= 1 else 1
    row_elems = 1
    for d in buf.shape[1:]:
        row_elems *= d
    chunks = _split_rows(rows, row_elems * buf.dtype.itemsize)
    nbytes = buf.size * buf.dtype.itemsize

    return pl.pallas_call(
        _make_dma_copy_kernel(chunks),
        out_shape=jax.ShapeDtypeStruct(buf.shape, buf.dtype),
        in_specs=[pl.BlockSpec(memory_space=pl.ANY)],
        out_specs=pl.BlockSpec(memory_space=pl.ANY),
        scratch_shapes=[pltpu.SemaphoreType.DMA((len(chunks),))],
        cost_estimate=pl.CostEstimate(
            flops=0, transcendentals=0, bytes_accessed=2 * nbytes),
    )(buf)


def _resolve_view_shape(in_size, shape):
    """torch.view shape resolution (single -1 allowed) with clear errors."""
    shape = list(shape)
    neg = [i for i, s in enumerate(shape) if s == -1]
    if len(neg) > 1:
        raise ValueError("view shape may contain at most one -1")
    if neg:
        known = 1
        for j, s in enumerate(shape):
            if j != neg[0]:
                known *= s
        if known == 0 or in_size % known != 0:
            raise ValueError(
                f"cannot view array of size {in_size} as shape {tuple(shape)}")
        shape[neg[0]] = in_size // known
    out_size = 1
    for s in shape:
        out_size *= s
    if out_size != in_size:
        raise ValueError(
            f"view shape {tuple(shape)} incompatible with input size {in_size}")
    return tuple(shape)


def view_forward(x: jax.Array, shape, *, materialize: bool = True,
                 small_bypass_bytes: int = _SMALL_BYPASS_BYTES) -> jax.Array:
    """Pallas-backed equivalent of `View(shape)(x)` == x.view(*shape).

    materialize=False returns the metadata-only reshape (true view: zero HBM
    traffic).  materialize=True copies the buffer with the HBM->HBM DMA
    kernel, then applies the target shape once as free metadata.
    Note: torch.view errors on non-contiguous tensors; JAX arrays are
    logically contiguous, so this behaves like reshape in that regard.
    """
    out_shape = _resolve_view_shape(x.size, shape)

    if not materialize:
        return x.reshape(out_shape)

    if x.size == 0:
        # Early return: do not issue a zero-length DMA.
        return jnp.zeros(out_shape, x.dtype)

    nbytes = x.size * x.dtype.itemsize
    if nbytes < small_bypass_bytes:
        # Pallas dispatch overhead dwarfs the sub-microsecond copy of tiny
        # buffers; a plain device copy is faster on every TPU generation.
        return jnp.copy(x).reshape(out_shape)

    copied = _pallas_dma_copy(x)
    return copied.reshape(out_shape)


if __name__ == "__main__":
    key = jax.random.PRNGKey(0)
    # NCHW input, small shapes.
    x = jax.random.normal(key, (2, 4, 16, 16), dtype=jnp.float32)

    target_shape = (2, -1)  # View((2, -1)): flatten C,H,W per sample.

    # Force the Pallas DMA-copy path even for this small self-test input
    # (the default small-tensor bypass would skip pallas_call).
    out = view_forward(x, target_shape, small_bypass_bytes=0)
    out = jax.block_until_ready(out)

    # Reference check against plain JAX reshape (== torch.view semantics).
    ref = x.reshape(2, -1)
    assert out.shape == (2, 4 * 16 * 16)
    assert out.dtype == x.dtype
    assert bool(jnp.array_equal(out, ref))

    # Also exercise the default fast path and the metadata-only path.
    out_fast = jax.block_until_ready(view_forward(x, target_shape))
    out_meta = jax.block_until_ready(
        view_forward(x, target_shape, materialize=False))
    assert bool(jnp.array_equal(out_fast, ref))
    assert bool(jnp.array_equal(out_meta, ref))

    print("KERNEL_OK")
</pallas_src>

<mosaic_0001>
module attributes {stable_mosaic.version = 11 : i64} {
  func.func @kernel(%arg0: memref<2x4x16x16xf32, #tpu.memory_space<any>>, %arg1: memref<2x4x16x16xf32, #tpu.memory_space<any>>, %arg2: memref<1x!tpu.dma_semaphore, #tpu.memory_space<semaphore_mem>>) attributes {dimension_semantics = [], scalar_prefetch = 0 : i64, scratch_operands = 1 : i64, tpu.core_type = #tpu.core_type<tc>} {
    %c0_i32 = arith.constant 0 : i32
    %0 = tpu.memref_slice %arg2[%c0_i32] : memref<1x!tpu.dma_semaphore, #tpu.memory_space<semaphore_mem>> -> memref<1x!tpu.dma_semaphore, #tpu.memory_space<semaphore_mem>>
    %1 = tpu.memref_squeeze %0 : memref<1x!tpu.dma_semaphore, #tpu.memory_space<semaphore_mem>> -> memref<!tpu.dma_semaphore, #tpu.memory_space<semaphore_mem>>
    tpu.enqueue_dma source(%arg0 : memref<2x4x16x16xf32, #tpu.memory_space<any>>) target(%arg1 : memref<2x4x16x16xf32, #tpu.memory_space<any>>) target_semaphore(%1 : memref<!tpu.dma_semaphore, #tpu.memory_space<semaphore_mem>>)
    %c0_i32_0 = arith.constant 0 : i32
    %2 = tpu.memref_slice %arg2[%c0_i32_0] : memref<1x!tpu.dma_semaphore, #tpu.memory_space<semaphore_mem>> -> memref<1x!tpu.dma_semaphore, #tpu.memory_space<semaphore_mem>>
    %3 = tpu.memref_squeeze %2 : memref<1x!tpu.dma_semaphore, #tpu.memory_space<semaphore_mem>> -> memref<!tpu.dma_semaphore, #tpu.memory_space<semaphore_mem>>
    tpu.wait_dma2 semaphore(%3 : memref<!tpu.dma_semaphore, #tpu.memory_space<semaphore_mem>>) src(%arg0 : memref<2x4x16x16xf32, #tpu.memory_space<any>>) dst(%arg1 : memref<2x4x16x16xf32, #tpu.memory_space<any>>)
    return
  }
}

</mosaic_0001>

<llo_original>
// kernel: tpu_custom_call.1
$region0: #{tpu_custom_call.1}
  #allocation0 [shape = 'u32[]', space=smem, size = 0x4, offset = 0x4, fixed_abs, tag = 'smem constant byte address 0x4 - core index']
  #allocation1 [shape = 'u32[144,128]{1,0:T(1,128)}', space=vmem, size = 0x12000, scoped, tag = 'internal scratch']
  #allocation2 [shape = 's32[1]{0}', space=sflag, size = 0x4, scoped, tag = 'scratch operand']
  #allocation3 [shape = 's32[]', space=sflag, size = 0x4, offset = 0, fixed_abs, tag = 'sflag constant byte address 0x0 - dummy sync flag']
  #allocation4 [shape = 'u32[0]{0}', space=smem, size = 0, offset = 0, fixed_abs, tag = 'smem constant byte address 0x0 - null']
  %s0 = inlined_call_operand.hbm [shape: f32[2,4,16,16], index: 0, kind: input, shape index: {}]
  %s1 = inlined_call_operand.hbm [shape: f32[2,4,16,16], index: 1, kind: output, shape index: {}]
  %s2 = sld [smem:[#allocation0]]
  $region2: #{tpu_custom_call.1} parent=0
    _
  %s4 = ssub.s32 1, %s2
  %s5 = scalar_select 0, %s4, %s2
  %s7 = sshll.u32 1, 14
  %s8 = sxor.u32 4294967295, %s7
  %s11 = sshll.u32 3, 24
  %s12 = sxor.u32 4294967295, %s11
  %s13 = sand.u32 0, %s12
  %s15 = sor.u32 %s13, 0
  %18 = dma.general %s0, 2048, %s1, [#allocation2], [#allocation3], [#allocation4], %s15, 0
  %s19 = smul.u32 2, 4
  %s20 = smul.u32 %s19, 16
  %s21 = smul.u32 %s20, 1
  %s22 = sshll.u32 %s21, 4
  %23 = dma.done [#allocation2], %s22
  %24 = vsyncmov [#allocation2]
  %s25 = vpop.sfrf %24
  %p26 = scmp.eq.s32.totalorder %s25, 0
  %p27 = pneg %p26
  %29 = shalt.err (%p27)

</llo_original>
